<compile_context>
chip_gen: v5e
topology: v5e:2x2
jax: 0.10.0
libtpu: 0.0.40
codegen_flags: <defaults>
</compile_context>

<pallas_src>
import functools

import jax
import jax.numpy as jnp
import numpy as np
from jax.experimental import pallas as pl
from jax.experimental.pallas import tpu as pltpu


def _round_up(v, m):
    return ((v + m - 1) // m) * m


def _pick_tn(total_n, cap):
    """Largest multiple of 128 that divides total_n and is <= cap."""
    best = 128
    t = 128
    while t <= min(total_n, cap):
        if total_n % t == 0:
            best = t
        t += 128
    return best


def _ensemble_kernel(x_ref, w_ref, bs_ref, s_ref, out_ref, acc_ref):
    # grid = (N_tiles, K_tiles); axis 1 (trailing) is the contraction axis.
    k = pl.program_id(1)

    @pl.when(k == 0)
    def _():
        acc_ref[...] = jnp.zeros_like(acc_ref)

    # (B, tk) @ (tk, tn) on the MXU, bf16 inputs, f32 accumulation.
    acc_ref[...] += jnp.dot(
        x_ref[...], w_ref[...], preferred_element_type=jnp.float32
    )

    @pl.when(k == pl.num_programs(1) - 1)
    def _():
        # Single-FMA finalize: w_i * (x @ W_i) + (w_i * b_i); lane-dense store.
        out_ref[...] = (acc_ref[...] * s_ref[...] + bs_ref[...]).astype(
            out_ref.dtype
        )


@functools.partial(jax.jit, static_argnames=("tk",))
def ensemble_forward(x, stacked_w, stacked_b, ens_w, *, tk=8192):
    """x: (B, C, H, W) NCHW.

    Returns (logits_e (B, NC), logits_stack (M, B, NC)).
    logits_stack[i] corresponds to logits_list[i] of the PyTorch module.
    """
    B = x.shape[0]
    D = 1
    for d in x.shape[1:]:
        D *= d
    M, D_w, NC = stacked_w.shape
    assert D_w == D, "flattened input dim must match weight contraction dim"

    # ---- padding / tile selection (all static shape math) ----
    NCp = _round_up(NC, 128)                 # lane-dense per-model class block
    total_n = M * NCp                        # fused N dimension
    tn = _pick_tn(total_n, cap=512)          # multiple of 128, divides total_n

    tk = _round_up(max(tk, 128), 128)
    tk_eff = min(tk, _round_up(D, 128))      # shrink for small D
    # Keep the double-buffered bf16 W stream under ~16 MiB of VMEM.
    w_buf_budget = 16 * 1024 * 1024
    max_tk = max(128, (w_buf_budget // (2 * tn * 2)) // 128 * 128)
    tk_eff = min(tk_eff, max_tk)
    Dp = _round_up(D, tk_eff)

    # ---- wrapper-side layout plumbing (bf16 inputs, fused weight slab) ----
    x_flat = x.reshape(B, D).astype(jnp.bfloat16)     # torch .view(B, -1) order
    if Dp > D:
        x_flat = jnp.pad(x_flat, ((0, 0), (0, Dp - D)))

    w = stacked_w.astype(jnp.bfloat16)
    if NCp > NC:
        w = jnp.pad(w, ((0, 0), (0, 0), (0, NCp - NC)))
    if Dp > D:
        w = jnp.pad(w, ((0, 0), (0, Dp - D), (0, 0)))
    # (M, Dp, NCp) -> (Dp, M*NCp): w_fused[:, i*NCp:(i+1)*NCp] == W_i
    w_fused = jnp.transpose(w, (1, 0, 2)).reshape(Dp, total_n)

    # per-model ensemble weight repeated over its padded class block
    scale = jnp.repeat(ens_w.astype(jnp.float32), NCp).reshape(1, total_n)

    b = stacked_b.astype(jnp.float32)
    if NCp > NC:
        b = jnp.pad(b, ((0, 0), (0, NCp - NC)))
    b_scaled = b.reshape(1, total_n) * scale           # fold w[i] into the bias

    grid = (total_n // tn, Dp // tk_eff)

    out_fused = pl.pallas_call(
        _ensemble_kernel,
        out_shape=jax.ShapeDtypeStruct((B, total_n), jnp.float32),
        grid_spec=pltpu.PrefetchScalarGridSpec(
            num_scalar_prefetch=0,
            grid=grid,
            in_specs=[
                pl.BlockSpec((B, tk_eff), lambda j, k: (0, k)),       # x
                pl.BlockSpec((tk_eff, tn), lambda j, k: (k, j)),      # W fused
                pl.BlockSpec((1, tn), lambda j, k: (0, j)),           # w*b
                pl.BlockSpec((1, tn), lambda j, k: (0, j)),           # scale
            ],
            out_specs=pl.BlockSpec((B, tn), lambda j, k: (0, j)),
            scratch_shapes=[pltpu.VMEM((B, tn), jnp.float32)],        # f32 acc
        ),
        compiler_params=pltpu.CompilerParams(
            dimension_semantics=("parallel", "arbitrary"),
            vmem_limit_bytes=48 * 1024 * 1024,   # headroom even on v7x (64 MiB)
        ),
    )(x_flat, w_fused, b_scaled, scale)

    # (B, M*NCp) -> (M, B, NC): per-model scaled logits, padding sliced off.
    per_model = jnp.transpose(out_fused.reshape(B, M, NCp), (1, 0, 2))[:, :, :NC]
    logits_e = jnp.sum(per_model, axis=0)
    return logits_e, per_model


if __name__ == "__main__":
    # Small, deterministic shapes consistent with the module's forward.
    B, C, H, W = 2, 4, 16, 16
    NUM_MODELS = 3
    NUM_CLASSES = 128
    D = C * H * W

    key = jax.random.PRNGKey(0)
    kx, kw, kb, kew = jax.random.split(key, 4)

    x = jax.random.normal(kx, (B, C, H, W), dtype=jnp.float32)
    stacked_w = 0.05 * jax.random.normal(kw, (NUM_MODELS, D, NUM_CLASSES), jnp.float32)
    stacked_b = 0.1 * jax.random.normal(kb, (NUM_MODELS, NUM_CLASSES), jnp.float32)
    ens_w = jnp.array([0.5, 0.3, 0.2], dtype=jnp.float32)  # ensemble weights w

    # tk=512 so the demo exercises the multi-step K accumulator (D=1024 -> 2 steps).
    logits_e, logits_stack = ensemble_forward(x, stacked_w, stacked_b, ens_w, tk=512)
    jax.block_until_ready(logits_e)
    jax.block_until_ready(logits_stack)

    # Pure-JAX f32 reference check (kernel uses bf16 inputs -> looser tolerance).
    x_flat = x.reshape(B, D)
    ref_list = [
        ens_w[i] * (x_flat @ stacked_w[i] + stacked_b[i]) for i in range(NUM_MODELS)
    ]
    ref_e = sum(ref_list)
    np.testing.assert_allclose(np.asarray(logits_e), np.asarray(ref_e),
                               rtol=2e-2, atol=2e-2)
    for i in range(NUM_MODELS):
        np.testing.assert_allclose(np.asarray(logits_stack[i]),
                                   np.asarray(ref_list[i]),
                                   rtol=2e-2, atol=2e-2)

    print("KERNEL_OK")
</pallas_src>

<mosaic_0001>
module attributes {stable_mosaic.version = 11 : i64} {
  func.func @_ensemble_kernel(%arg0: i32, %arg1: i32, %arg2: memref<2x512xbf16, #tpu.memory_space<vmem>>, %arg3: memref<512x384xbf16, #tpu.memory_space<vmem>>, %arg4: memref<1x384xf32, #tpu.memory_space<vmem>>, %arg5: memref<1x384xf32, #tpu.memory_space<vmem>>, %arg6: memref<2x384xf32, #tpu.memory_space<vmem>>, %arg7: memref<2x384xf32, #tpu.memory_space<vmem>>) attributes {dimension_semantics = [#tpu.dimension_semantics<parallel>, #tpu.dimension_semantics<arbitrary>], iteration_bounds = array<i64: 1, 2>, scalar_prefetch = 0 : i64, scratch_operands = 1 : i64, tpu.core_type = #tpu.core_type<tc>, window_params = [{transform_indices = @transform_0, window_bounds = array<i64: 2, 512>}, {transform_indices = @transform_1, window_bounds = array<i64: 512, 384>}, {transform_indices = @transform_2, window_bounds = array<i64: 1, 384>}, {transform_indices = @transform_3, window_bounds = array<i64: 1, 384>}, {transform_indices = @transform_4, window_bounds = array<i64: 2, 384>}]} {
    %c0_i32 = arith.constant 0 : i32
    %0 = arith.cmpi eq, %arg1, %c0_i32 : i32
    %1 = arith.extui %0 : i1 to i32
    %c0_i32_0 = arith.constant 0 : i32
    %2 = arith.cmpi ne, %1, %c0_i32_0 : i32
    scf.if %2 {
      %cst_9 = arith.constant 0.000000e+00 : f32
      %12 = vector.broadcast %cst_9 : f32 to vector<2x384xf32>
      %c0_10 = arith.constant 0 : index
      %c0_11 = arith.constant 0 : index
      %13 = vector.load %arg7[%c0_10, %c0_11] : memref<2x384xf32, #tpu.memory_space<vmem>>, vector<2x384xf32>
      tpu.vector_store %arg7[%c0_10, %c0_11], %12 {strides = array<i32>} : memref<2x384xf32, #tpu.memory_space<vmem>>, vector<2x384xf32>,
    } else {
    }
    %c0 = arith.constant 0 : index
    %c0_1 = arith.constant 0 : index
    %3 = vector.load %arg7[%c0, %c0_1] : memref<2x384xf32, #tpu.memory_space<vmem>>, vector<2x384xf32>
    %c0_2 = arith.constant 0 : index
    %c0_3 = arith.constant 0 : index
    %4 = vector.load %arg2[%c0_2, %c0_3] : memref<2x512xbf16, #tpu.memory_space<vmem>>, vector<2x512xbf16>
    %c0_4 = arith.constant 0 : index
    %c0_5 = arith.constant 0 : index
    %5 = vector.load %arg3[%c0_4, %c0_5] : memref<512x384xbf16, #tpu.memory_space<vmem>>, vector<512x384xbf16>
    %cst = arith.constant dense<0.000000e+00> : vector<2x384xf32>
    %6 = tpu.matmul %4, %5, %cst {dimension_numbers = #tpu.dot_dimension_numbers<[1], [0], [0], [1], [0, 0, 1, 1], [], []>} : vector<2x512xbf16>, vector<512x384xbf16>, vector<2x384xf32> -> vector<2x384xf32>
    %7 = arith.addf %3, %6 : vector<2x384xf32>
    %c0_6 = arith.constant 0 : index
    %c0_7 = arith.constant 0 : index
    %8 = vector.load %arg7[%c0_6, %c0_7] : memref<2x384xf32, #tpu.memory_space<vmem>>, vector<2x384xf32>
    tpu.vector_store %arg7[%c0_6, %c0_7], %7 {strides = array<i32>} : memref<2x384xf32, #tpu.memory_space<vmem>>, vector<2x384xf32>,
    %c1_i32 = arith.constant 1 : i32
    %9 = arith.cmpi eq, %arg1, %c1_i32 : i32
    %10 = arith.extui %9 : i1 to i32
    %c0_i32_8 = arith.constant 0 : i32
    %11 = arith.cmpi ne, %10, %c0_i32_8 : i32
    scf.if %11 {
      %c0_9 = arith.constant 0 : index
      %c0_10 = arith.constant 0 : index
      %12 = vector.load %arg7[%c0_9, %c0_10] : memref<2x384xf32, #tpu.memory_space<vmem>>, vector<2x384xf32>
      %c0_11 = arith.constant 0 : index
      %c0_12 = arith.constant 0 : index
      %13 = vector.load %arg5[%c0_11, %c0_12] : memref<1x384xf32, #tpu.memory_space<vmem>>, vector<1x384xf32>
      %14 = vector.broadcast %13 : vector<1x384xf32> to vector<2x384xf32>
      %15 = arith.mulf %12, %14 : vector<2x384xf32>
      %c0_13 = arith.constant 0 : index
      %c0_14 = arith.constant 0 : index
      %16 = vector.load %arg4[%c0_13, %c0_14] : memref<1x384xf32, #tpu.memory_space<vmem>>, vector<1x384xf32>
      %17 = vector.broadcast %16 : vector<1x384xf32> to vector<2x384xf32>
      %18 = arith.addf %15, %17 : vector<2x384xf32>
      %c0_15 = arith.constant 0 : index
      %c0_16 = arith.constant 0 : index
      %19 = vector.load %arg6[%c0_15, %c0_16] : memref<2x384xf32, #tpu.memory_space<vmem>>, vector<2x384xf32>
      tpu.vector_store %arg6[%c0_15, %c0_16], %18 {strides = array<i32>} : memref<2x384xf32, #tpu.memory_space<vmem>>, vector<2x384xf32>,
    } else {
    }
    return
  }
  func.func @transform_0(%arg0: i32, %arg1: i32) -> (i32, i32) {
    %c0_i32 = arith.constant 0 : i32
    %c0_i32_0 = arith.constant 0 : i32
    return %c0_i32, %arg1 : i32, i32
  }
  func.func @transform_1(%arg0: i32, %arg1: i32) -> (i32, i32) {
    %c0_i32 = arith.constant 0 : i32
    return %arg1, %arg0 : i32, i32
  }
  func.func @transform_2(%arg0: i32, %arg1: i32) -> (i32, i32) {
    %c0_i32 = arith.constant 0 : i32
    %c0_i32_0 = arith.constant 0 : i32
    return %c0_i32, %arg0 : i32, i32
  }
  func.func @transform_3(%arg0: i32, %arg1: i32) -> (i32, i32) {
    %c0_i32 = arith.constant 0 : i32
    %c0_i32_0 = arith.constant 0 : i32
    return %c0_i32, %arg0 : i32, i32
  }
  func.func @transform_4(%arg0: i32, %arg1: i32) -> (i32, i32) {
    %c0_i32 = arith.constant 0 : i32
    %c0_i32_0 = arith.constant 0 : i32
    return %c0_i32, %arg0 : i32, i32
  }
}

</mosaic_0001>

<llo_original>
// kernel: ensemble_forward.1
$region0: #{ensemble_forward.1}
  #allocation0 [shape = 'u32[]', space=smem, size = 0x4, offset = 0x4, fixed_abs, tag = 'smem constant byte address 0x4 - core index']
  #allocation1 [shape = 'u32[72,128]{1,0:T(1,128)}', space=vmem, size = 0x9000, scoped, tag = 'internal scratch']
  #allocation2 [shape = 'f32[2,384]{1,0:T(2,128)}', space=vmem, size = 0xc00, scoped, tag = 'scratch operand']
  %s0 = inlined_call_operand.vmem [shape: bf16[2,1024], index: 0, kind: input, shape index: {}]
  %s1 = inlined_call_operand.vmem [shape: bf16[1024,384], index: 1, kind: input, shape index: {}]
  %s2 = inlined_call_operand.vmem [shape: f32[1,384], index: 2, kind: input, shape index: {}]
  %s3 = inlined_call_operand.vmem [shape: f32[1,384], index: 3, kind: input, shape index: {}]
  %s4 = inlined_call_operand.vmem [shape: f32[2,384], index: 4, kind: output, shape index: {}]
  %s5 = sld [smem:[#allocation0]]
  $region57: #{ensemble_forward.1} parent=0
    _
  %s7 = ssub.s32 1, %s5
  %s8 = scalar_select 0, %s7, %s5
  loop: start=0, step=1, limit=4
  $region2: #{ensemble_forward.1} parent=0 // loop_pre_header
    _
  $region3: #{ensemble_forward.1} parent=0 // loop_header
    %s10 = sphi 0, %s14
    %p11 = scmp.ge.s32.totalorder %s10, 4
    %s17 = sphi 0, %s29
    %s18 = sphi 0, %s25
    %s19 = sphi 0, %s17
    %s20 = sphi 0, %s18
    %s21 = sphi 0, %s19
    %s22 = sphi 0, %s20
    %s32 = sphi 0, %s34
    %s35 = sphi 0, %s32
    %s36 = sphi 0, %s35
    %s52 = sphi 0, %s36
    %s60 = sphi 0, %s62
    %s63 = sphi 0, %s60
    %s64 = sphi 0, %s63
    %s80 = sphi 0, %s64
    %s86 = sphi 0, %s88
    %s89 = sphi 0, %s86
    %s90 = sphi 0, %s89
    %s106 = sphi 0, %s90
    %s112 = sphi 0, %s114
    %s115 = sphi 0, %s112
    %s116 = sphi 0, %s115
    %s132 = sphi 0, %s116
    %s138 = sphi 0, %s140
    %s141 = sphi 0, %s138
    %s142 = sphi 0, %s141
    %s158 = sphi 0, %s142
  $region4: #{ensemble_forward.1} parent=0 // loop_header_branch
    %13 = sbr.rel (%p11) target = $region8
  $region5: #{ensemble_forward.1} parent=0 // loop_body
    %s15 = ssub.s32 %s10, 1
    %s16 = ssub.s32 %s10, 2
    %s23 = sadd.s32 1, %s18
    %p24 = scmp.ge.s32.totalorder %s23, 2
    %s25 = scalar_select %p24, 0, %s23
    %s26 = sadd.s32 1, %s17
    %s27 = scalar_select %p24, %s26, %s17
    %p28 = scmp.ge.s32.totalorder %s27, 1
    %s29 = scalar_select %p28, 0, %s27
    %s30 = ssub.s32 %s18, %s25
    %p31 = scmp.eq.s32.totalorder %s30, 0
    %s33 = sadd.s32 %s32, 1
    %s34 = scalar_select %p31, %s32, %s33
    %p37 = pneg %p31
    %p38 = scmp.eq.s32.totalorder %s10, 1
    %p39 = por %p37, %p38
    %p40 = scmp.ne.s32.totalorder %s32, %s35
    %p41 = scmp.eq.s32.totalorder %s10, 0
    %p42 = por %p40, %p41
    %p43 = scmp.ne.s32.totalorder %s32, %s35
    %p44 = scmp.eq.s32.totalorder %s15, 1
    %p45 = por %p43, %p44
    %p46 = scmp.ne.s32.totalorder %s35, %s36
    %p47 = scmp.eq.s32.totalorder %s15, 0
    %p48 = por %p46, %p47
    %p49 = scmp.ne.s32.totalorder %s35, %s36
    %p50 = scmp.eq.s32.totalorder %s16, 1
    %p51 = por %p49, %p50
    %p53 = scmp.ne.s32.totalorder %s36, %s52
    %p54 = scmp.eq.s32.totalorder %s16, 0
    %p55 = por %p53, %p54
    %s56 = ssub.s32 %s18, %s25
    %s57 = ssub.s32 %s17, %s29
    %s58 = sor.u32 %s56, %s57
    %p59 = scmp.eq.s32.totalorder %s58, 0
    %s61 = sadd.s32 %s60, 1
    %s62 = scalar_select %p59, %s60, %s61
    %p65 = pneg %p59
    %p66 = scmp.eq.s32.totalorder %s10, 1
    %p67 = por %p65, %p66
    %p68 = scmp.ne.s32.totalorder %s60, %s63
    %p69 = scmp.eq.s32.totalorder %s10, 0
    %p70 = por %p68, %p69
    %p71 = scmp.ne.s32.totalorder %s60, %s63
    %p72 = scmp.eq.s32.totalorder %s15, 1
    %p73 = por %p71, %p72
    %p74 = scmp.ne.s32.totalorder %s63, %s64
    %p75 = scmp.eq.s32.totalorder %s15, 0
    %p76 = por %p74, %p75
    %p77 = scmp.ne.s32.totalorder %s63, %s64
    %p78 = scmp.eq.s32.totalorder %s16, 1
    %p79 = por %p77, %p78
    %p81 = scmp.ne.s32.totalorder %s64, %s80
    %p82 = scmp.eq.s32.totalorder %s16, 0
    %p83 = por %p81, %p82
    %s84 = ssub.s32 %s17, %s29
    %p85 = scmp.eq.s32.totalorder %s84, 0
    %s87 = sadd.s32 %s86, 1
    %s88 = scalar_select %p85, %s86, %s87
    %p91 = pneg %p85
    %p92 = scmp.eq.s32.totalorder %s10, 1
    %p93 = por %p91, %p92
    %p94 = scmp.ne.s32.totalorder %s86, %s89
    %p95 = scmp.eq.s32.totalorder %s10, 0
    %p96 = por %p94, %p95
    %p97 = scmp.ne.s32.totalorder %s86, %s89
    %p98 = scmp.eq.s32.totalorder %s15, 1
    %p99 = por %p97, %p98
    %p100 = scmp.ne.s32.totalorder %s89, %s90
    %p101 = scmp.eq.s32.totalorder %s15, 0
    %p102 = por %p100, %p101
    %p103 = scmp.ne.s32.totalorder %s89, %s90
    %p104 = scmp.eq.s32.totalorder %s16, 1
    %p105 = por %p103, %p104
    %p107 = scmp.ne.s32.totalorder %s90, %s106
    %p108 = scmp.eq.s32.totalorder %s16, 0
    %p109 = por %p107, %p108
    %s110 = ssub.s32 %s17, %s29
    %p111 = scmp.eq.s32.totalorder %s110, 0
    %s113 = sadd.s32 %s112, 1
    %s114 = scalar_select %p111, %s112, %s113
    %p117 = pneg %p111
    %p118 = scmp.eq.s32.totalorder %s10, 1
    %p119 = por %p117, %p118
    %p120 = scmp.ne.s32.totalorder %s112, %s115
    %p121 = scmp.eq.s32.totalorder %s10, 0
    %p122 = por %p120, %p121
    %p123 = scmp.ne.s32.totalorder %s112, %s115
    %p124 = scmp.eq.s32.totalorder %s15, 1
    %p125 = por %p123, %p124
    %p126 = scmp.ne.s32.totalorder %s115, %s116
    %p127 = scmp.eq.s32.totalorder %s15, 0
    %p128 = por %p126, %p127
    %p129 = scmp.ne.s32.totalorder %s115, %s116
    %p130 = scmp.eq.s32.totalorder %s16, 1
    %p131 = por %p129, %p130
    %p133 = scmp.ne.s32.totalorder %s116, %s132
    %p134 = scmp.eq.s32.totalorder %s16, 0
    %p135 = por %p133, %p134
    %s136 = ssub.s32 %s17, %s29
    %p137 = scmp.eq.s32.totalorder %s136, 0
    %s139 = sadd.s32 %s138, 1
    %s140 = scalar_select %p137, %s138, %s139
    %p143 = pneg %p137
    %p144 = scmp.eq.s32.totalorder %s10, 1
    %p145 = por %p143, %p144
    %p146 = scmp.ne.s32.totalorder %s138, %s141
    %p147 = scmp.eq.s32.totalorder %s10, 0
    %p148 = por %p146, %p147
    %p149 = scmp.ne.s32.totalorder %s138, %s141
    %p150 = scmp.eq.s32.totalorder %s15, 1
    %p151 = por %p149, %p150
    %p152 = scmp.ne.s32.totalorder %s141, %s142
    %p153 = scmp.eq.s32.totalorder %s15, 0
    %p154 = por %p152, %p153
    %p155 = scmp.ne.s32.totalorder %s141, %s142
    %p156 = scmp.eq.s32.totalorder %s16, 1
    %p157 = por %p155, %p156
    %p159 = scmp.ne.s32.totalorder %s142, %s158
    %p160 = scmp.eq.s32.totalorder %s16, 0
    %p161 = por %p159, %p160
    %p162 = scmp.le.s32.totalorder 1, %s10
    %p163 = scmp.lt.s32.totalorder %s10, 3
    %p164 = pnand %p162, %p163
    %p165 = pneg %p164
    // Predicated region
    $region9: #{ensemble_forward.1} parent=5 // pred_check
      _
    $region10: #{ensemble_forward.1} parent=5 // pred_check_branch
      %167 = sbr.rel (%p164) target = $region12
    $region11: #{ensemble_forward.1} parent=5 // pred_region
      %s168 = ssub.s32 %s10, 1
      // Predicated region
      $region13: #{ensemble_forward.1} parent=11 // pred_check
        %p169 = pneg %p102
      $region14: #{ensemble_forward.1} parent=11 // pred_check_branch
        %171 = sbr.rel (%p169) target = $region16
      $region15: #{ensemble_forward.1} parent=11 // pred_region
        %s172 = smul.u32 3, %s19
        %p173 = scmp.lt.s32.totalorder %s172, 2
        %s174 = scalar_select %p173, %s172, 2
        %s175 = scalar_lea.vmem %s2, %s174
        %s176 = smul.u32 3, %s19
      $region16: #{ensemble_forward.1} parent=11 // pred_fallthru
        _
      // Predicated region
      $region17: #{ensemble_forward.1} parent=11 // pred_check
        %p177 = pneg %p128
      $region18: #{ensemble_forward.1} parent=11 // pred_check_branch
        %179 = sbr.rel (%p177) target = $region20
      $region19: #{ensemble_forward.1} parent=11 // pred_region
        %s180 = smul.u32 3, %s19
        %p181 = scmp.lt.s32.totalorder %s180, 2
        %s182 = scalar_select %p181, %s180, 2
        %s183 = scalar_lea.vmem %s3, %s182
        %s184 = smul.u32 3, %s19
      $region20: #{ensemble_forward.1} parent=11 // pred_fallthru
        _
    $region12: #{ensemble_forward.1} parent=5 // pred_fallthru
      _
    %p185 = scmp.lt.s32.totalorder %s10, 2
    // Predicated region
    $region21: #{ensemble_forward.1} parent=5 // pred_check
      %p186 = pneg %p185
    $region22: #{ensemble_forward.1} parent=5 // pred_check_branch
      %188 = sbr.rel (%p186) target = $region24
    $region23: #{ensemble_forward.1} parent=5 // pred_region
      // Predicated region
      $region25: #{ensemble_forward.1} parent=23 // pred_check
        %p189 = pneg %p42
      $region26: #{ensemble_forward.1} parent=23 // pred_check_branch
        %191 = sbr.rel (%p189) target = $region28
      $region27: #{ensemble_forward.1} parent=23 // pred_region
        %s192 = smul.u32 4, %s18
        %p193 = scmp.lt.s32.totalorder %s192, 7
        %s194 = scalar_select %p193, %s192, 7
        %s195 = scalar_lea.vmem %s0, %s194
        %s196 = smul.u32 4, %s18
      $region28: #{ensemble_forward.1} parent=23 // pred_fallthru
        _
      // Predicated region
      $region29: #{ensemble_forward.1} parent=23 // pred_check
        %p197 = pneg %p70
      $region30: #{ensemble_forward.1} parent=23 // pred_check_branch
        %199 = sbr.rel (%p197) target = $region32
      $region31: #{ensemble_forward.1} parent=23 // pred_region
        %s200 = smul.u32 64, %s18
        %s201 = smul.u32 3, %s17
        %p202 = scmp.lt.s32.totalorder %s200, 127
        %s203 = scalar_select %p202, %s200, 127
        %p204 = scmp.lt.s32.totalorder %s201, 2
        %s205 = scalar_select %p204, %s201, 2
        %s206 = smul.addr %s203, 3
        %s207 = sadd.s32 %s205, %s206
        %s208 = smul.addr %s207, 4
        %s209 = scalar_lea.vmem %s1, %s208
        %s210 = smul.u32 64, %s18
        %s211 = smul.u32 3, %s17
      $region32: #{ensemble_forward.1} parent=23 // pred_fallthru
        _
    $region24: #{ensemble_forward.1} parent=5 // pred_fallthru
      _
    %p212 = scmp.le.s32.totalorder 1, %s10
    %p213 = scmp.lt.s32.totalorder %s10, 3
    %p214 = pnand %p212, %p213
    %p215 = pneg %p214
    // Predicated region
    $region33: #{ensemble_forward.1} parent=5 // pred_check
      _
    $region34: #{ensemble_forward.1} parent=5 // pred_check_branch
      %217 = sbr.rel (%p214) target = $region36
    $region35: #{ensemble_forward.1} parent=5 // pred_region
      %s218 = ssub.s32 %s10, 1
      %s219 = smul.u32 4, %s20
      %p220 = scmp.lt.s32.totalorder %s219, 7
      %s221 = scalar_select %p220, %s219, 7
      %s222 = scalar_lea.vmem %s0, %s221
      %p223 = pneg %p48
      %p224 = pneg %p45
      %s225 = smul.u32 64, %s20
      %s226 = smul.u32 3, %s19
      %p227 = scmp.lt.s32.totalorder %s225, 127
      %s228 = scalar_select %p227, %s225, 127
      %p229 = scmp.lt.s32.totalorder %s226, 2
      %s230 = scalar_select %p229, %s226, 2
      %s231 = smul.addr %s228, 3
      %s232 = sadd.s32 %s230, %s231
      %s233 = smul.addr %s232, 4
      %s234 = scalar_lea.vmem %s1, %s233
      %p235 = pneg %p76
      %p236 = pneg %p73
      %s237 = smul.u32 3, %s19
      %p238 = scmp.lt.s32.totalorder %s237, 2
      %s239 = scalar_select %p238, %s237, 2
      %s240 = scalar_lea.vmem %s2, %s239
      %p241 = pneg %p102
      %p242 = pneg %p99
      %s243 = smul.u32 3, %s19
      %p244 = scmp.lt.s32.totalorder %s243, 2
      %s245 = scalar_select %p244, %s243, 2
      %s246 = scalar_lea.vmem %s3, %s245
      %p247 = pneg %p128
      %p248 = pneg %p125
      %p249 = pneg %p154
      %p250 = pneg %p151
      %s251 = smul.u32 3, %s19
      %p252 = scmp.lt.s32.totalorder %s251, 2
      %s253 = scalar_select %p252, %s251, 2
      %s254 = smul.addr %s253, 2
      %s255 = scalar_lea.vmem %s4, %s254
      %s256 = smul.u32 4, %s20
      %p257 = scmp.lt.s32.totalorder %s256, 7
      %s258 = scalar_select %p257, %s256, 7
      %s259 = scalar_lea.vmem %s0, %s258
      %s260 = smul.u32 4, %s20
      %s261 = smul.u32 64, %s20
      %s262 = smul.u32 3, %s19
      %p263 = scmp.lt.s32.totalorder %s261, 127
      %s264 = scalar_select %p263, %s261, 127
      %p265 = scmp.lt.s32.totalorder %s262, 2
      %s266 = scalar_select %p265, %s262, 2
      %s267 = smul.addr %s264, 3
      %s268 = sadd.s32 %s266, %s267
      %s269 = smul.addr %s268, 4
      %s270 = scalar_lea.vmem %s1, %s269
      %s271 = smul.u32 64, %s20
      %s272 = smul.u32 3, %s19
      %s273 = smul.u32 3, %s19
      %p274 = scmp.lt.s32.totalorder %s273, 2
      %s275 = scalar_select %p274, %s273, 2
      %s276 = scalar_lea.vmem %s2, %s275
      %s277 = smul.u32 3, %s19
      %s278 = smul.u32 3, %s19
      %p279 = scmp.lt.s32.totalorder %s278, 2
      %s280 = scalar_select %p279, %s278, 2
      %s281 = scalar_lea.vmem %s3, %s280
      %s282 = smul.u32 3, %s19
      %s283 = smul.u32 3, %s19
      %p284 = scmp.lt.s32.totalorder %s283, 2
      %s285 = scalar_select %p284, %s283, 2
      %s286 = smul.addr %s285, 2
      %s287 = scalar_lea.vmem %s4, %s286
      %s288 = smul.u32 3, %s19
      %p289 = scmp.eq.s32.totalorder %s20, 0
      // Predicated region
      $region37: #{ensemble_forward.1} parent=35 // pred_check
        %p290 = pneg %p289
      $region38: #{ensemble_forward.1} parent=35 // pred_check_branch
        %292 = sbr.rel (%p290) target = $region40
      $region39: #{ensemble_forward.1} parent=35 // pred_region
        %293 = vst [vmem:[#allocation2] sm:$0x3f] 0.0
      $region40: #{ensemble_forward.1} parent=35 // pred_fallthru
        _
      %v294 = vld [vmem:[#allocation2] sm:$0x3f]
      %v295 = vld [vmem:[%s259] sm:$0xf]
      %v296 = vld [vmem:[%s270] sm:$0xff]
      %v297 = vld [vmem:[%s270 + $0x8] sm:$0xf]
      %v298 = vld [vmem:[%s270 + $0xc] sm:$0xff]
      %v299 = vld [vmem:[%s270 + $0x14] sm:$0xf]
      %v300 = vld [vmem:[%s270 + $0x18] sm:$0xff]
      %v301 = vld [vmem:[%s270 + $0x20] sm:$0xf]
      %v302 = vld [vmem:[%s270 + $0x24] sm:$0xff]
      %v303 = vld [vmem:[%s270 + $0x2c] sm:$0xf]
      %v304 = vld [vmem:[%s270 + $0x30] sm:$0xff]
      %v305 = vld [vmem:[%s270 + $0x38] sm:$0xf]
      %v306 = vld [vmem:[%s270 + $0x3c] sm:$0xff]
      %v307 = vld [vmem:[%s270 + $0x44] sm:$0xf]
      %v308 = vld [vmem:[%s270 + $0x48] sm:$0xff]
      %v309 = vld [vmem:[%s270 + $0x50] sm:$0xf]
      %v310 = vld [vmem:[%s270 + $0x54] sm:$0xff]
      %v311 = vld [vmem:[%s270 + $0x5c] sm:$0xf]
      %v312 = vld [vmem:[%s270 + $0x60] sm:$0xff]
      %v313 = vld [vmem:[%s270 + $0x68] sm:$0xf]
      %v314 = vld [vmem:[%s270 + $0x6c] sm:$0xff]
      %v315 = vld [vmem:[%s270 + $0x74] sm:$0xf]
      %v316 = vld [vmem:[%s270 + $0x78] sm:$0xff]
      %v317 = vld [vmem:[%s270 + $0x80] sm:$0xf]
      %v318 = vld [vmem:[%s270 + $0x84] sm:$0xff]
      %v319 = vld [vmem:[%s270 + $0x8c] sm:$0xf]
      %v320 = vld [vmem:[%s270 + $0x90] sm:$0xff]
      %v321 = vld [vmem:[%s270 + $0x98] sm:$0xf]
      %v322 = vld [vmem:[%s270 + $0x9c] sm:$0xff]
      %v323 = vld [vmem:[%s270 + $0xa4] sm:$0xf]
      %v324 = vld [vmem:[%s270 + $0xa8] sm:$0xff]
      %v325 = vld [vmem:[%s270 + $0xb0] sm:$0xf]
      %v326 = vld [vmem:[%s270 + $0xb4] sm:$0xff]
      %v327 = vld [vmem:[%s270 + $0xbc] sm:$0xf]
      %v328 = vld [vmem:[%s270 + $0xc0] sm:$0xff]
      %v329 = vld [vmem:[%s270 + $0xc8] sm:$0xf]
      %v330 = vld [vmem:[%s270 + $0xcc] sm:$0xff]
      %v331 = vld [vmem:[%s270 + $0xd4] sm:$0xf]
      %v332 = vld [vmem:[%s270 + $0xd8] sm:$0xff]
      %v333 = vld [vmem:[%s270 + $0xe0] sm:$0xf]
      %v334 = vld [vmem:[%s270 + $0xe4] sm:$0xff]
      %v335 = vld [vmem:[%s270 + $0xec] sm:$0xf]
      %v336 = vld [vmem:[%s270 + $0xf0] sm:$0xff]
      %v337 = vld [vmem:[%s270 + $0xf8] sm:$0xf]
      %v338 = vld [vmem:[%s270 + $0xfc] sm:$0xff]
      %v339 = vld [vmem:[%s270 + $0x104] sm:$0xf]
      %v340 = vld [vmem:[%s270 + $0x108] sm:$0xff]
      %v341 = vld [vmem:[%s270 + $0x110] sm:$0xf]
      %v342 = vld [vmem:[%s270 + $0x114] sm:$0xff]
      %v343 = vld [vmem:[%s270 + $0x11c] sm:$0xf]
      %v344 = vld [vmem:[%s270 + $0x120] sm:$0xff]
      %v345 = vld [vmem:[%s270 + $0x128] sm:$0xf]
      %v346 = vld [vmem:[%s270 + $0x12c] sm:$0xff]
      %v347 = vld [vmem:[%s270 + $0x134] sm:$0xf]
      %v348 = vld [vmem:[%s270 + $0x138] sm:$0xff]
      %v349 = vld [vmem:[%s270 + $0x140] sm:$0xf]
      %v350 = vld [vmem:[%s270 + $0x144] sm:$0xff]
      %v351 = vld [vmem:[%s270 + $0x14c] sm:$0xf]
      %v352 = vld [vmem:[%s270 + $0x150] sm:$0xff]
      %v353 = vld [vmem:[%s270 + $0x158] sm:$0xf]
      %v354 = vld [vmem:[%s270 + $0x15c] sm:$0xff]
      %v355 = vld [vmem:[%s270 + $0x164] sm:$0xf]
      %v356 = vld [vmem:[%s270 + $0x168] sm:$0xff]
      %v357 = vld [vmem:[%s270 + $0x170] sm:$0xf]
      %v358 = vld [vmem:[%s270 + $0x174] sm:$0xff]
      %v359 = vld [vmem:[%s270 + $0x17c] sm:$0xf]
      %v360 = vld [vmem:[%s270 + $0x180] sm:$0xff]
      %v361 = vld [vmem:[%s270 + $0x188] sm:$0xf]
      %v362 = vld [vmem:[%s270 + $0x18c] sm:$0xff]
      %v363 = vld [vmem:[%s270 + $0x194] sm:$0xf]
      %v364 = vld [vmem:[%s270 + $0x198] sm:$0xff]
      %v365 = vld [vmem:[%s270 + $0x1a0] sm:$0xf]
      %v366 = vld [vmem:[%s270 + $0x1a4] sm:$0xff]
      %v367 = vld [vmem:[%s270 + $0x1ac] sm:$0xf]
      %v368 = vld [vmem:[%s270 + $0x1b0] sm:$0xff]
      %v369 = vld [vmem:[%s270 + $0x1b8] sm:$0xf]
      %v370 = vld [vmem:[%s270 + $0x1bc] sm:$0xff]
      %v371 = vld [vmem:[%s270 + $0x1c4] sm:$0xf]
      %v372 = vld [vmem:[%s270 + $0x1c8] sm:$0xff]
      %v373 = vld [vmem:[%s270 + $0x1d0] sm:$0xf]
      %v374 = vld [vmem:[%s270 + $0x1d4] sm:$0xff]
      %v375 = vld [vmem:[%s270 + $0x1dc] sm:$0xf]
      %v376 = vld [vmem:[%s270 + $0x1e0] sm:$0xff]
      %v377 = vld [vmem:[%s270 + $0x1e8] sm:$0xf]
      %v378 = vld [vmem:[%s270 + $0x1ec] sm:$0xff]
      %v379 = vld [vmem:[%s270 + $0x1f4] sm:$0xf]
      %v380 = vld [vmem:[%s270 + $0x1f8] sm:$0xff]
      %v381 = vld [vmem:[%s270 + $0x200] sm:$0xf]
      %v382 = vld [vmem:[%s270 + $0x204] sm:$0xff]
      %v383 = vld [vmem:[%s270 + $0x20c] sm:$0xf]
      %v384 = vld [vmem:[%s270 + $0x210] sm:$0xff]
      %v385 = vld [vmem:[%s270 + $0x218] sm:$0xf]
      %v386 = vld [vmem:[%s270 + $0x21c] sm:$0xff]
      %v387 = vld [vmem:[%s270 + $0x224] sm:$0xf]
      %v388 = vld [vmem:[%s270 + $0x228] sm:$0xff]
      %v389 = vld [vmem:[%s270 + $0x230] sm:$0xf]
      %v390 = vld [vmem:[%s270 + $0x234] sm:$0xff]
      %v391 = vld [vmem:[%s270 + $0x23c] sm:$0xf]
      %v392 = vld [vmem:[%s270 + $0x240] sm:$0xff]
      %v393 = vld [vmem:[%s270 + $0x248] sm:$0xf]
      %v394 = vld [vmem:[%s270 + $0x24c] sm:$0xff]
      %v395 = vld [vmem:[%s270 + $0x254] sm:$0xf]
      %v396 = vld [vmem:[%s270 + $0x258] sm:$0xff]
      %v397 = vld [vmem:[%s270 + $0x260] sm:$0xf]
      %v398 = vld [vmem:[%s270 + $0x264] sm:$0xff]
      %v399 = vld [vmem:[%s270 + $0x26c] sm:$0xf]
      %v400 = vld [vmem:[%s270 + $0x270] sm:$0xff]
      %v401 = vld [vmem:[%s270 + $0x278] sm:$0xf]
      %v402 = vld [vmem:[%s270 + $0x27c] sm:$0xff]
      %v403 = vld [vmem:[%s270 + $0x284] sm:$0xf]
      %v404 = vld [vmem:[%s270 + $0x288] sm:$0xff]
      %v405 = vld [vmem:[%s270 + $0x290] sm:$0xf]
      %v406 = vld [vmem:[%s270 + $0x294] sm:$0xff]
      %v407 = vld [vmem:[%s270 + $0x29c] sm:$0xf]
      %v408 = vld [vmem:[%s270 + $0x2a0] sm:$0xff]
      %v409 = vld [vmem:[%s270 + $0x2a8] sm:$0xf]
      %v410 = vld [vmem:[%s270 + $0x2ac] sm:$0xff]
      %v411 = vld [vmem:[%s270 + $0x2b4] sm:$0xf]
      %v412 = vld [vmem:[%s270 + $0x2b8] sm:$0xff]
      %v413 = vld [vmem:[%s270 + $0x2c0] sm:$0xf]
      %v414 = vld [vmem:[%s270 + $0x2c4] sm:$0xff]
      %v415 = vld [vmem:[%s270 + $0x2cc] sm:$0xf]
      %v416 = vld [vmem:[%s270 + $0x2d0] sm:$0xff]
      %v417 = vld [vmem:[%s270 + $0x2d8] sm:$0xf]
      %v418 = vld [vmem:[%s270 + $0x2dc] sm:$0xff]
      %v419 = vld [vmem:[%s270 + $0x2e4] sm:$0xf]
      %v420 = vld [vmem:[%s270 + $0x2e8] sm:$0xff]
      %v421 = vld [vmem:[%s270 + $0x2f0] sm:$0xf]
      %v422 = vld [vmem:[%s270 + $0x2f4] sm:$0xff]
      %v423 = vld [vmem:[%s270 + $0x2fc] sm:$0xf]
      %425 = vst [vmem:[#allocation1] ss:$9 sm:$0xff] %v295
      %v426 = vld [vmem:[#allocation1] sm:$0xff]
      %v427 = vld [vmem:[#allocation1 + $0x9] sm:$0xff]
      %v428 = vld [vmem:[#allocation1 + $0x12] sm:$0xff]
      %v429 = vld [vmem:[#allocation1 + $0x1b] sm:$0xff]
      %v562 = vunpack.c.l.b16 %v296
      %v563 = vunpack.c.h.b16 %v296
      %v564 = vunpack.c.l.b16 %v297
      %v565 = vunpack.c.l.b16 %v298
      %v566 = vunpack.c.h.b16 %v298
      %v567 = vunpack.c.l.b16 %v299
      %v568 = vunpack.c.l.b16 %v300
      %v569 = vunpack.c.h.b16 %v300
      %v570 = vunpack.c.l.b16 %v301
      %v571 = vunpack.c.l.b16 %v302
      %v572 = vunpack.c.h.b16 %v302
      %v573 = vunpack.c.l.b16 %v303
      %v574 = vunpack.c.l.b16 %v304
      %v575 = vunpack.c.h.b16 %v304
      %v576 = vunpack.c.l.b16 %v305
      %v577 = vunpack.c.l.b16 %v306
      %v578 = vunpack.c.h.b16 %v306
      %v579 = vunpack.c.l.b16 %v307
      %v580 = vunpack.c.l.b16 %v308
      %v581 = vunpack.c.h.b16 %v308
      %v582 = vunpack.c.l.b16 %v309
      %v583 = vunpack.c.l.b16 %v310
      %v584 = vunpack.c.h.b16 %v310
      %v585 = vunpack.c.l.b16 %v311
      %v586 = vunpack.c.l.b16 %v312
      %v587 = vunpack.c.h.b16 %v312
      %v588 = vunpack.c.l.b16 %v313
      %v589 = vunpack.c.l.b16 %v314
      %v590 = vunpack.c.h.b16 %v314
      %v591 = vunpack.c.l.b16 %v315
      %v592 = vunpack.c.l.b16 %v316
      %v593 = vunpack.c.h.b16 %v316
      %v594 = vunpack.c.l.b16 %v317
      %v595 = vunpack.c.l.b16 %v318
      %v596 = vunpack.c.h.b16 %v318
      %v597 = vunpack.c.l.b16 %v319
      %v598 = vunpack.c.l.b16 %v320
      %v599 = vunpack.c.h.b16 %v320
      %v600 = vunpack.c.l.b16 %v321
      %v601 = vunpack.c.l.b16 %v322
      %v602 = vunpack.c.h.b16 %v322
      %v603 = vunpack.c.l.b16 %v323
      %v604 = vunpack.c.l.b16 %v324
      %v605 = vunpack.c.h.b16 %v324
      %v606 = vunpack.c.l.b16 %v325
      %v607 = vunpack.c.l.b16 %v326
      %v608 = vunpack.c.h.b16 %v326
      %v609 = vunpack.c.l.b16 %v327
      %v610 = vunpack.c.l.b16 %v328
      %v611 = vunpack.c.h.b16 %v328
      %v612 = vunpack.c.l.b16 %v329
      %v613 = vunpack.c.l.b16 %v330
      %v614 = vunpack.c.h.b16 %v330
      %v615 = vunpack.c.l.b16 %v331
      %v616 = vunpack.c.l.b16 %v332
      %v617 = vunpack.c.h.b16 %v332
      %v618 = vunpack.c.l.b16 %v333
      %v619 = vunpack.c.l.b16 %v334
      %v620 = vunpack.c.h.b16 %v334
      %v621 = vunpack.c.l.b16 %v335
      %v622 = vunpack.c.l.b16 %v336
      %v623 = vunpack.c.h.b16 %v336
      %v624 = vunpack.c.l.b16 %v337
      %v625 = vunpack.c.l.b16 %v338
      %v626 = vunpack.c.h.b16 %v338
      %v627 = vunpack.c.l.b16 %v339
      %v628 = vunpack.c.l.b16 %v340
      %v629 = vunpack.c.h.b16 %v340
      %v630 = vunpack.c.l.b16 %v341
      %v631 = vunpack.c.l.b16 %v342
      %v632 = vunpack.c.h.b16 %v342
      %v633 = vunpack.c.l.b16 %v343
      %v634 = vunpack.c.l.b16 %v344
      %v635 = vunpack.c.h.b16 %v344
      %v636 = vunpack.c.l.b16 %v345
      %v637 = vunpack.c.l.b16 %v346
      %v638 = vunpack.c.h.b16 %v346
      %v639 = vunpack.c.l.b16 %v347
      %v640 = vunpack.c.l.b16 %v348
      %v641 = vunpack.c.h.b16 %v348
      %v642 = vunpack.c.l.b16 %v349
      %v643 = vunpack.c.l.b16 %v350
      %v644 = vunpack.c.h.b16 %v350
      %v645 = vunpack.c.l.b16 %v351
      %v646 = vunpack.c.l.b16 %v352
      %v647 = vunpack.c.h.b16 %v352
      %v648 = vunpack.c.l.b16 %v353
      %v649 = vunpack.c.l.b16 %v354
      %v650 = vunpack.c.h.b16 %v354
      %v651 = vunpack.c.l.b16 %v355
      %v652 = vunpack.c.l.b16 %v356
      %v653 = vunpack.c.h.b16 %v356
      %v654 = vunpack.c.l.b16 %v357
      %v655 = vunpack.c.l.b16 %v358
      %v656 = vunpack.c.h.b16 %v358
      %v657 = vunpack.c.l.b16 %v359
      %v658 = vunpack.c.l.b16 %v360
      %v659 = vunpack.c.h.b16 %v360
      %v660 = vunpack.c.l.b16 %v361
      %v661 = vunpack.c.l.b16 %v362
      %v662 = vunpack.c.h.b16 %v362
      %v663 = vunpack.c.l.b16 %v363
      %v664 = vunpack.c.l.b16 %v364
      %v665 = vunpack.c.h.b16 %v364
      %v666 = vunpack.c.l.b16 %v365
      %v667 = vunpack.c.l.b16 %v366
      %v668 = vunpack.c.h.b16 %v366
      %v669 = vunpack.c.l.b16 %v367
      %v670 = vunpack.c.l.b16 %v368
      %v671 = vunpack.c.h.b16 %v368
      %v672 = vunpack.c.l.b16 %v369
      %v673 = vunpack.c.l.b16 %v370
      %v674 = vunpack.c.h.b16 %v370
      %v675 = vunpack.c.l.b16 %v371
      %v676 = vunpack.c.l.b16 %v372
      %v677 = vunpack.c.h.b16 %v372
      %v678 = vunpack.c.l.b16 %v373
      %v679 = vunpack.c.l.b16 %v374
      %v680 = vunpack.c.h.b16 %v374
      %v681 = vunpack.c.l.b16 %v375
      %v682 = vunpack.c.l.b16 %v376
      %v683 = vunpack.c.h.b16 %v376
      %v684 = vunpack.c.l.b16 %v377
      %v685 = vunpack.c.l.b16 %v378
      %v686 = vunpack.c.h.b16 %v378
      %v687 = vunpack.c.l.b16 %v379
      %v688 = vunpack.c.l.b16 %v380
      %v689 = vunpack.c.h.b16 %v380
      %v690 = vunpack.c.l.b16 %v381
      %v691 = vunpack.c.l.b16 %v382
      %v692 = vunpack.c.h.b16 %v382
      %v693 = vunpack.c.l.b16 %v383
      %v694 = vunpack.c.l.b16 %v384
      %v695 = vunpack.c.h.b16 %v384
      %v696 = vunpack.c.l.b16 %v385
      %v697 = vunpack.c.l.b16 %v386
      %v698 = vunpack.c.h.b16 %v386
      %v699 = vunpack.c.l.b16 %v387
      %v700 = vunpack.c.l.b16 %v388
      %v701 = vunpack.c.h.b16 %v388
      %v702 = vunpack.c.l.b16 %v389
      %v703 = vunpack.c.l.b16 %v390
      %v704 = vunpack.c.h.b16 %v390
      %v705 = vunpack.c.l.b16 %v391
      %v706 = vunpack.c.l.b16 %v392
      %v707 = vunpack.c.h.b16 %v392
      %v708 = vunpack.c.l.b16 %v393
      %v709 = vunpack.c.l.b16 %v394
      %v710 = vunpack.c.h.b16 %v394
      %v711 = vunpack.c.l.b16 %v395
      %v712 = vunpack.c.l.b16 %v396
      %v713 = vunpack.c.h.b16 %v396
      %v714 = vunpack.c.l.b16 %v397
      %v715 = vunpack.c.l.b16 %v398
      %v716 = vunpack.c.h.b16 %v398
      %v717 = vunpack.c.l.b16 %v399
      %v718 = vunpack.c.l.b16 %v400
      %v719 = vunpack.c.h.b16 %v400
      %v720 = vunpack.c.l.b16 %v401
      %v721 = vunpack.c.l.b16 %v402
      %v722 = vunpack.c.h.b16 %v402
      %v723 = vunpack.c.l.b16 %v403
      %v724 = vunpack.c.l.b16 %v404
      %v725 = vunpack.c.h.b16 %v404
      %v726 = vunpack.c.l.b16 %v405
      %v727 = vunpack.c.l.b16 %v406
      %v728 = vunpack.c.h.b16 %v406
      %v729 = vunpack.c.l.b16 %v407
      %v730 = vunpack.c.l.b16 %v408
      %v731 = vunpack.c.h.b16 %v408
      %v732 = vunpack.c.l.b16 %v409
      %v733 = vunpack.c.l.b16 %v410
      %v734 = vunpack.c.h.b16 %v410
      %v735 = vunpack.c.l.b16 %v411
      %v736 = vunpack.c.l.b16 %v412
      %v737 = vunpack.c.h.b16 %v412
      %v738 = vunpack.c.l.b16 %v413
      %v739 = vunpack.c.l.b16 %v414
      %v740 = vunpack.c.h.b16 %v414
      %v741 = vunpack.c.l.b16 %v415
      %v742 = vunpack.c.l.b16 %v416
      %v743 = vunpack.c.h.b16 %v416
      %v744 = vunpack.c.l.b16 %v417
      %v745 = vunpack.c.l.b16 %v418
      %v746 = vunpack.c.h.b16 %v418
      %v747 = vunpack.c.l.b16 %v419
      %v748 = vunpack.c.l.b16 %v420
      %v749 = vunpack.c.h.b16 %v420
      %v750 = vunpack.c.l.b16 %v421
      %v751 = vunpack.c.l.b16 %v422
      %v752 = vunpack.c.h.b16 %v422
      %v753 = vunpack.c.l.b16 %v423
      %v754 = vpack.c.b16 %v565, %v562
      %v755 = vpack.c.b16 %v566, %v563
      %v756 = vpack.c.b16 %v567, %v564
      %v757 = vpack.c.b16 %v571, %v568
      %v758 = vpack.c.b16 %v572, %v569
      %v759 = vpack.c.b16 %v573, %v570
      %v760 = vpack.c.b16 %v577, %v574
      %v761 = vpack.c.b16 %v578, %v575
      %v762 = vpack.c.b16 %v579, %v576
      %v763 = vpack.c.b16 %v583, %v580
      %v764 = vpack.c.b16 %v584, %v581
      %v765 = vpack.c.b16 %v585, %v582
      %v766 = vpack.c.b16 %v589, %v586
      %v767 = vpack.c.b16 %v590, %v587
      %v768 = vpack.c.b16 %v591, %v588
      %v769 = vpack.c.b16 %v595, %v592
      %v770 = vpack.c.b16 %v596, %v593
      %v771 = vpack.c.b16 %v597, %v594
      %v772 = vpack.c.b16 %v601, %v598
      %v773 = vpack.c.b16 %v602, %v599
      %v774 = vpack.c.b16 %v603, %v600
      %v775 = vpack.c.b16 %v607, %v604
      %v776 = vpack.c.b16 %v608, %v605
      %v777 = vpack.c.b16 %v609, %v606
      %v778 = vpack.c.b16 %v613, %v610
      %v779 = vpack.c.b16 %v614, %v611
      %v780 = vpack.c.b16 %v615, %v612
      %v781 = vpack.c.b16 %v619, %v616
      %v782 = vpack.c.b16 %v620, %v617
      %v783 = vpack.c.b16 %v621, %v618
      %v784 = vpack.c.b16 %v625, %v622
      %v785 = vpack.c.b16 %v626, %v623
      %v786 = vpack.c.b16 %v627, %v624
      %v787 = vpack.c.b16 %v631, %v628
      %v788 = vpack.c.b16 %v632, %v629
      %v789 = vpack.c.b16 %v633, %v630
      %v790 = vpack.c.b16 %v637, %v634
      %v791 = vpack.c.b16 %v638, %v635
      %v792 = vpack.c.b16 %v639, %v636
      %v793 = vpack.c.b16 %v643, %v640
      %v794 = vpack.c.b16 %v644, %v641
      %v795 = vpack.c.b16 %v645, %v642
      %v796 = vpack.c.b16 %v649, %v646
      %v797 = vpack.c.b16 %v650, %v647
      %v798 = vpack.c.b16 %v651, %v648
      %v799 = vpack.c.b16 %v655, %v652
      %v800 = vpack.c.b16 %v656, %v653
      %v801 = vpack.c.b16 %v657, %v654
      %v802 = vpack.c.b16 %v661, %v658
      %v803 = vpack.c.b16 %v662, %v659
      %v804 = vpack.c.b16 %v663, %v660
      %v805 = vpack.c.b16 %v667, %v664
      %v806 = vpack.c.b16 %v668, %v665
      %v807 = vpack.c.b16 %v669, %v666
      %v808 = vpack.c.b16 %v673, %v670
      %v809 = vpack.c.b16 %v674, %v671
      %v810 = vpack.c.b16 %v675, %v672
      %v811 = vpack.c.b16 %v679, %v676
      %v812 = vpack.c.b16 %v680, %v677
      %v813 = vpack.c.b16 %v681, %v678
      %v814 = vpack.c.b16 %v685, %v682
      %v815 = vpack.c.b16 %v686, %v683
      %v816 = vpack.c.b16 %v687, %v684
      %v817 = vpack.c.b16 %v691, %v688
      %v818 = vpack.c.b16 %v692, %v689
      %v819 = vpack.c.b16 %v693, %v690
      %v820 = vpack.c.b16 %v697, %v694
      %v821 = vpack.c.b16 %v698, %v695
      %v822 = vpack.c.b16 %v699, %v696
      %v823 = vpack.c.b16 %v703, %v700
      %v824 = vpack.c.b16 %v704, %v701
      %v825 = vpack.c.b16 %v705, %v702
      %v826 = vpack.c.b16 %v709, %v706
      %v827 = vpack.c.b16 %v710, %v707
      %v828 = vpack.c.b16 %v711, %v708
      %v829 = vpack.c.b16 %v715, %v712
      %v830 = vpack.c.b16 %v716, %v713
      %v831 = vpack.c.b16 %v717, %v714
      %v832 = vpack.c.b16 %v721, %v718
      %v833 = vpack.c.b16 %v722, %v719
      %v834 = vpack.c.b16 %v723, %v720
      %v835 = vpack.c.b16 %v727, %v724
      %v836 = vpack.c.b16 %v728, %v725
      %v837 = vpack.c.b16 %v729, %v726
      %v838 = vpack.c.b16 %v733, %v730
      %v839 = vpack.c.b16 %v734, %v731
      %v840 = vpack.c.b16 %v735, %v732
      %v841 = vpack.c.b16 %v739, %v736
      %v842 = vpack.c.b16 %v740, %v737
      %v843 = vpack.c.b16 %v741, %v738
      %v844 = vpack.c.b16 %v745, %v742
      %v845 = vpack.c.b16 %v746, %v743
      %v846 = vpack.c.b16 %v747, %v744
      %v847 = vpack.c.b16 %v751, %v748
      %v848 = vpack.c.b16 %v752, %v749
      %v849 = vpack.c.b16 %v753, %v750
      %946 = vmatpush.bf16.msra.mxu0 %v775
      %947 = vmatpush.bf16.msra.mxu0 %v772
      %948 = vmatpush.bf16.msra.mxu0 %v769
      %949 = vmatpush.bf16.msra.mxu0 %v766
      %950 = vmatpush.bf16.msra.mxu0 %v763
      %951 = vmatpush.bf16.msra.mxu0 %v760
      %952 = vmatpush.bf16.msra.mxu0 %v757
      %953 = vmatpush.bf16.msra.mxu0 %v754
      %954 = vmatmul.bf16.gmra.mxu0 %v426
      %v955 = vpop.f32.mrf.mxu0
      %v956 = vadd.f32 0.0, %v955
      %v957 = vpop.f32.mrf.mxu0
      %958 = vdwg.mxu0
      %959 = vmatpush.bf16.msra.mxu0 %v799
      %960 = vmatpush.bf16.msra.mxu0 %v796
      %961 = vmatpush.bf16.msra.mxu0 %v793
      %962 = vmatpush.bf16.msra.mxu0 %v790
      %963 = vmatpush.bf16.msra.mxu0 %v787
      %964 = vmatpush.bf16.msra.mxu0 %v784
      %965 = vmatpush.bf16.msra.mxu0 %v781
      %966 = vmatpush.bf16.msra.mxu0 %v778
      %967 = vmatmul.bf16.gmra.mxu0 %v427
      %v968 = vpop.f32.mrf.mxu0
      %v969 = vadd.f32 %v956, %v968
      %v970 = vpop.f32.mrf.mxu0
      %971 = vdwg.mxu0
      %972 = vmatpush.bf16.msra.mxu0 %v823
      %973 = vmatpush.bf16.msra.mxu0 %v820
      %974 = vmatpush.bf16.msra.mxu0 %v817
      %975 = vmatpush.bf16.msra.mxu0 %v814
      %976 = vmatpush.bf16.msra.mxu0 %v811
      %977 = vmatpush.bf16.msra.mxu0 %v808
      %978 = vmatpush.bf16.msra.mxu0 %v805
      %979 = vmatpush.bf16.msra.mxu0 %v802
      %980 = vmatmul.bf16.gmra.mxu0 %v428
      %v981 = vpop.f32.mrf.mxu0
      %v982 = vadd.f32 %v969, %v981
      %v983 = vpop.f32.mrf.mxu0
      %984 = vdwg.mxu0
      %985 = vmatpush.bf16.msra.mxu0 %v847
      %986 = vmatpush.bf16.msra.mxu0 %v844
      %987 = vmatpush.bf16.msra.mxu0 %v841
      %988 = vmatpush.bf16.msra.mxu0 %v838
      %989 = vmatpush.bf16.msra.mxu0 %v835
      %990 = vmatpush.bf16.msra.mxu0 %v832
      %991 = vmatpush.bf16.msra.mxu0 %v829
      %992 = vmatpush.bf16.msra.mxu0 %v826
      %993 = vmatmul.bf16.gmra.mxu0 %v429
      %v994 = vpop.f32.mrf.mxu0
      %v995 = vadd.f32 %v982, %v994
      %v996 = vpop.f32.mrf.mxu0
      %997 = vdwg.mxu0
      %998 = vmatpush.bf16.msra.mxu0 %v776
      %999 = vmatpush.bf16.msra.mxu0 %v773
      %1000 = vmatpush.bf16.msra.mxu0 %v770
      %1001 = vmatpush.bf16.msra.mxu0 %v767
      %1002 = vmatpush.bf16.msra.mxu0 %v764
      %1003 = vmatpush.bf16.msra.mxu0 %v761
      %1004 = vmatpush.bf16.msra.mxu0 %v758
      %1005 = vmatpush.bf16.msra.mxu0 %v755
      %1006 = vmatmul.bf16.gmra.mxu0 %v426
      %v1007 = vpop.f32.mrf.mxu0
      %v1008 = vadd.f32 0.0, %v1007
      %v1009 = vpop.f32.mrf.mxu0
      %1010 = vdwg.mxu0
      %1011 = vmatpush.bf16.msra.mxu0 %v800
      %1012 = vmatpush.bf16.msra.mxu0 %v797
      %1013 = vmatpush.bf16.msra.mxu0 %v794
      %1014 = vmatpush.bf16.msra.mxu0 %v791
      %1015 = vmatpush.bf16.msra.mxu0 %v788
      %1016 = vmatpush.bf16.msra.mxu0 %v785
      %1017 = vmatpush.bf16.msra.mxu0 %v782
      %1018 = vmatpush.bf16.msra.mxu0 %v779
      %1019 = vmatmul.bf16.gmra.mxu0 %v427
      %v1020 = vpop.f32.mrf.mxu0
      %v1021 = vadd.f32 %v1008, %v1020
      %v1022 = vpop.f32.mrf.mxu0
      %1023 = vdwg.mxu0
      %1024 = vmatpush.bf16.msra.mxu0 %v824
      %1025 = vmatpush.bf16.msra.mxu0 %v821
      %1026 = vmatpush.bf16.msra.mxu0 %v818
      %1027 = vmatpush.bf16.msra.mxu0 %v815
      %1028 = vmatpush.bf16.msra.mxu0 %v812
      %1029 = vmatpush.bf16.msra.mxu0 %v809
      %1030 = vmatpush.bf16.msra.mxu0 %v806
      %1031 = vmatpush.bf16.msra.mxu0 %v803
      %1032 = vmatmul.bf16.gmra.mxu0 %v428
      %v1033 = vpop.f32.mrf.mxu0
      %v1034 = vadd.f32 %v1021, %v1033
      %v1035 = vpop.f32.mrf.mxu0
      %1036 = vdwg.mxu0
      %1037 = vmatpush.bf16.msra.mxu0 %v848
      %1038 = vmatpush.bf16.msra.mxu0 %v845
      %1039 = vmatpush.bf16.msra.mxu0 %v842
      %1040 = vmatpush.bf16.msra.mxu0 %v839
      %1041 = vmatpush.bf16.msra.mxu0 %v836
      %1042 = vmatpush.bf16.msra.mxu0 %v833
      %1043 = vmatpush.bf16.msra.mxu0 %v830
      %1044 = vmatpush.bf16.msra.mxu0 %v827
      %1045 = vmatmul.bf16.gmra.mxu0 %v429
      %v1046 = vpop.f32.mrf.mxu0
      %v1047 = vadd.f32 %v1034, %v1046
      %v1048 = vpop.f32.mrf.mxu0
      %1049 = vdwg.mxu0
      %1050 = vmatpush.bf16.msra.mxu0 %v777
      %1051 = vmatpush.bf16.msra.mxu0 %v774
      %1052 = vmatpush.bf16.msra.mxu0 %v771
      %1053 = vmatpush.bf16.msra.mxu0 %v768
      %1054 = vmatpush.bf16.msra.mxu0 %v765
      %1055 = vmatpush.bf16.msra.mxu0 %v762
      %1056 = vmatpush.bf16.msra.mxu0 %v759
      %1057 = vmatpush.bf16.msra.mxu0 %v756
      %1058 = vmatmul.bf16.gmra.mxu0 %v426
      %v1059 = vpop.f32.mrf.mxu0
      %v1060 = vadd.f32 0.0, %v1059
      %v1061 = vpop.f32.mrf.mxu0
      %1062 = vdwg.mxu0
      %1063 = vmatpush.bf16.msra.mxu0 %v801
      %1064 = vmatpush.bf16.msra.mxu0 %v798
      %1065 = vmatpush.bf16.msra.mxu0 %v795
      %1066 = vmatpush.bf16.msra.mxu0 %v792
      %1067 = vmatpush.bf16.msra.mxu0 %v789
      %1068 = vmatpush.bf16.msra.mxu0 %v786
      %1069 = vmatpush.bf16.msra.mxu0 %v783
      %1070 = vmatpush.bf16.msra.mxu0 %v780
      %1071 = vmatmul.bf16.gmra.mxu0 %v427
      %v1072 = vpop.f32.mrf.mxu0
      %v1073 = vadd.f32 %v1060, %v1072
      %v1074 = vpop.f32.mrf.mxu0
      %1075 = vdwg.mxu0
      %1076 = vmatpush.bf16.msra.mxu0 %v825
      %1077 = vmatpush.bf16.msra.mxu0 %v822
      %1078 = vmatpush.bf16.msra.mxu0 %v819
      %1079 = vmatpush.bf16.msra.mxu0 %v816
      %1080 = vmatpush.bf16.msra.mxu0 %v813
      %1081 = vmatpush.bf16.msra.mxu0 %v810
      %1082 = vmatpush.bf16.msra.mxu0 %v807
      %1083 = vmatpush.bf16.msra.mxu0 %v804
      %1084 = vmatmul.bf16.gmra.mxu0 %v428
      %v1085 = vpop.f32.mrf.mxu0
      %v1086 = vadd.f32 %v1073, %v1085
      %v1087 = vpop.f32.mrf.mxu0
      %1088 = vdwg.mxu0
      %1089 = vmatpush.bf16.msra.mxu0 %v849
      %1090 = vmatpush.bf16.msra.mxu0 %v846
      %1091 = vmatpush.bf16.msra.mxu0 %v843
      %1092 = vmatpush.bf16.msra.mxu0 %v840
      %1093 = vmatpush.bf16.msra.mxu0 %v837
      %1094 = vmatpush.bf16.msra.mxu0 %v834
      %1095 = vmatpush.bf16.msra.mxu0 %v831
      %1096 = vmatpush.bf16.msra.mxu0 %v828
      %1097 = vmatmul.bf16.gmra.mxu0 %v429
      %v1098 = vpop.f32.mrf.mxu0
      %v1099 = vadd.f32 %v1086, %v1098
      %v1100 = vpop.f32.mrf.mxu0
      %1101 = vdwg.mxu0
      %v1105 = vrot.slane %v1047, 6
      %v1106 = vrot.slane %v1099, 4
      %vm1107 = vcmask 1041408
      %v1108 = vsel %vm1107, %v995, %v1105
      %vm1109 = vcmask 1043456
      %v1110 = vsel %vm1109, %v1108, %v1106
      %v1112 = vadd.f32 %v294, %v1110
      %1113 = vst [vmem:[#allocation2] sm:$0x3f] %v1112
      %p1114 = scmp.eq.s32.totalorder %s20, 1
      // Predicated region
      $region41: #{ensemble_forward.1} parent=35 // pred_check
        %p1115 = pneg %p1114
      $region42: #{ensemble_forward.1} parent=35 // pred_check_branch
        %1117 = sbr.rel (%p1115) target = $region44
      $region43: #{ensemble_forward.1} parent=35 // pred_region
        %v1118 = vld [vmem:[#allocation2] sm:$0x3f]
        %v1119 = vld [vmem:[%s281] sm:$0x7]
        %v1121 = vperm.slane %v1119, 0
        %v1122 = vperm.slane %v1119, 1
        %v1123 = vperm.slane %v1119, 2
        %v1124 = vrot.slane %v1122, 6
        %v1125 = vrot.slane %v1123, 4
        %v1126 = vsel %vm1107, %v1121, %v1124
        %v1127 = vsel %vm1109, %v1126, %v1125
        %v1129 = vmul.f32 %v1118, %v1127
        %v1130 = vld [vmem:[%s276] sm:$0x7]
        %v1132 = vperm.slane %v1130, 0
        %v1133 = vperm.slane %v1130, 1
        %v1134 = vperm.slane %v1130, 2
        %v1135 = vrot.slane %v1133, 6
        %v1136 = vrot.slane %v1134, 4
        %v1137 = vsel %vm1107, %v1132, %v1135
        %v1138 = vsel %vm1109, %v1137, %v1136
        %v1140 = vadd.f32 %v1129, %v1138
        %1141 = vst [vmem:[%s287] sm:$0x3f] %v1140
      $region44: #{ensemble_forward.1} parent=35 // pred_fallthru
        _
      %s1142 = smul.u32 3, %s19
      %p1143 = scmp.lt.s32.totalorder %s1142, 2
      %s1144 = scalar_select %p1143, %s1142, 2
      %s1145 = smul.addr %s1144, 2
      %s1146 = scalar_lea.vmem %s4, %s1145
      // Predicated region
      $region45: #{ensemble_forward.1} parent=35 // pred_check
        %p1147 = pneg %p151
      $region46: #{ensemble_forward.1} parent=35 // pred_check_branch
        %1149 = sbr.rel (%p1147) target = $region48
      $region47: #{ensemble_forward.1} parent=35 // pred_region
        %s1150 = smul.u32 3, %s19
      $region48: #{ensemble_forward.1} parent=35 // pred_fallthru
        _
      // Predicated region
      $region49: #{ensemble_forward.1} parent=35 // pred_check
        %p1151 = pneg %p151
      $region50: #{ensemble_forward.1} parent=35 // pred_check_branch
        %1153 = sbr.rel (%p1151) target = $region52
      $region51: #{ensemble_forward.1} parent=35 // pred_region
        %s1154 = smul.u32 3, %s19
        %p1155 = scmp.lt.s32.totalorder %s1154, 2
        %s1156 = scalar_select %p1155, %s1154, 2
        %s1157 = smul.addr %s1156, 2
        %s1158 = scalar_lea.vmem %s4, %s1157
      $region52: #{ensemble_forward.1} parent=35 // pred_fallthru
        _
    $region36: #{ensemble_forward.1} parent=5 // pred_fallthru
      _
    %p1159 = scmp.le.s32.totalorder 2, %s10
    // Predicated region
    $region53: #{ensemble_forward.1} parent=5 // pred_check
      %p1160 = pneg %p1159
    $region54: #{ensemble_forward.1} parent=5 // pred_check_branch
      %1162 = sbr.rel (%p1160) target = $region56
    $region55: #{ensemble_forward.1} parent=5 // pred_region
      %s1163 = ssub.s32 %s10, 2
    $region56: #{ensemble_forward.1} parent=5 // pred_fallthru
      _
  $region6: #{ensemble_forward.1} parent=0 // loop_footer
    %s14 = sadd.s32 1, %s10
  $region7: #{ensemble_forward.1} parent=0 // loop_footer_branch
    %9 = sbr.rel target = $region3
  $region8: #{ensemble_forward.1} parent=0 // loop_exit
    _

</llo_original>
